<compile_context>
chip_gen: v7x
topology: tpu7x:2x2x1
jax: 0.10.0
libtpu: 0.0.40
codegen_flags: <defaults>
</compile_context>

<pallas_src>
import functools

import numpy as np
import jax
import jax.numpy as jnp
from jax.experimental import pallas as pl
from jax.experimental.pallas import tpu as pltpu


# --------------------------------------------------------------------------- #
# Hardware detection (generation-aware budgets; safe fallbacks)
# --------------------------------------------------------------------------- #
def _device_kind():
    try:
        return jax.devices()[0].device_kind.lower()
    except Exception:
        return ""


def _vmem_capacity_bytes():
    try:
        cap = int(pltpu.get_tpu_info().vmem_capacity_bytes)
        if cap > 0:
            return cap
    except Exception:
        pass
    kind = _device_kind()
    if "v5" in kind or "v6" in kind:
        return 128 << 20
    return 64 << 20          # conservative default (v7x per-TC VMEM)


def _use_bf16_exp():
    # bf16 EUP exists on v6e / v7x; keep f32 exp elsewhere (e.g. v5e).
    kind = _device_kind()
    return ("v6" in kind) or ("v7" in kind) or ("7x" in kind)


def _target_min_row_tiles():
    # v7x has 2 TensorCores sharing the "parallel" row axis: aim for >= 4 tiles.
    kind = _device_kind()
    return 4 if ("v7" in kind or "7x" in kind) else 1


# --------------------------------------------------------------------------- #
# Kernel body
# --------------------------------------------------------------------------- #
def _make_dino_tile_kernel(use_bf16_exp):
    """Kernel for one (row-tile, student-crop) grid step."""

    def _exp(x):
        if use_bf16_exp:
            return jnp.exp(x.astype(jnp.bfloat16)).astype(jnp.float32)
        return jnp.exp(x)

    def kernel(temps_ref,       # SMEM (2,)        : [1/student_temp, 1/teacher_temp]
               student_ref,     # VMEM (R, D)      : row tile of student crop v
               teacher_ref,     # VMEM (2, R, D)   : row tile of both teacher crops
               center_ref,      # VMEM (1, D)      : current center
               loss_ref,        # VMEM (1, 1, 128) : per-tile CE sum (resident over v)
               tsum_ref,        # VMEM (1, 1, D)   : per-tile teacher column sum
               q_ref):          # VMEM (3, R, D)   : scratch [q0, q1, q0+q1]
        v = pl.program_id(1)
        inv_student_temp = temps_ref[0]
        inv_teacher_temp = temps_ref[1]

        # Once per row tile: teacher softmax -> q scratch, teacher column sum,
        # zero the loss accumulator.
        @pl.when(v == 0)
        def _():
            t = teacher_ref[...].astype(jnp.float32)                 # (2, R, D)
            c = center_ref[...].astype(jnp.float32)                  # (1, D)
            tl = (t - c) * inv_teacher_temp
            tl = tl - jnp.max(tl, axis=-1, keepdims=True)
            te = _exp(tl)
            inv_den = 1.0 / jnp.sum(te, axis=-1, keepdims=True)      # exact, tiny
            q = te * inv_den                                         # (2, R, D)
            q_ref[0] = q[0]
            q_ref[1] = q[1]
            q_ref[2] = q[0] + q[1]
            tsum_ref[...] = jnp.sum(t, axis=(0, 1), keepdims=True)   # (1, 1, D)
            loss_ref[...] = jnp.zeros_like(loss_ref)

        # Every step: log-softmax of student crop v (max on raw values, temperature
        # folded into the shift) and weighted cross-entropy accumulation.
        s_raw = student_ref[...]                                     # (R, D), bf16 ok
        m = jnp.max(s_raw, axis=-1, keepdims=True).astype(jnp.float32)
        sl = (s_raw.astype(jnp.float32) - m) * inv_student_temp      # (R, D)
        log_z = jnp.log(jnp.sum(_exp(sl), axis=-1, keepdims=True))
        logp = sl - log_z                                            # (R, D)

        # Folded DINO double loop: w_0 = q1, w_1 = q0, w_{v>=2} = q0 + q1.
        widx = jnp.where(v == 0, 1, jnp.where(v == 1, 0, 2))
        w = q_ref[widx]                                              # (R, D) f32
        contrib = -jnp.sum(w * logp)                                 # scalar
        loss_ref[...] += contrib

    return kernel


# --------------------------------------------------------------------------- #
# VMEM budgeting / tiling
# --------------------------------------------------------------------------- #
def _vmem_block_estimate(tile_rows, D, in_itemsize):
    rd = tile_rows * D
    return int(
        2 * 3 * rd * in_itemsize     # double-buffered student(1)+teacher(2) blocks
        + 3 * rd * 4                 # q scratch (q0, q1, q0+q1) f32
        + 10 * rd * 4                # peak f32 temporaries (teacher-softmax branch)
        + 8 * D * 4 + 4 * 128 * 4    # center + per-tile output blocks
        + (2 << 20))                 # misc headroom


def _choose_tile_rows(B, D, in_itemsize, *, budget_bytes, min_tiles=1):
    # Minimal sublane granularity by dtype packing (f32: 8, bf16: 16, int8/fp8: 32).
    min_rows = 8 if in_itemsize >= 4 else (16 if in_itemsize == 2 else 32)
    candidates = [r for r in (2048, 1024, 512, 256, 128, 64, 32, 16, 8)
                  if min_rows <= r <= B and B % r == 0]
    if not candidates:
        # Tiny / irregular batch: one full-extent row tile (block == full dim).
        if _vmem_block_estimate(B, D, in_itemsize) > budget_bytes:
            raise ValueError(
                f"ViewPredLoss Pallas kernel: batch={B}, out_dim={D} does not fit "
                f"the VMEM budget ({budget_bytes >> 20} MiB).")
        return B
    tile = None
    for r in candidates:  # descending: biggest tile that fits the VMEM budget
        if _vmem_block_estimate(r, D, in_itemsize) <= budget_bytes:
            tile = r
            break
    if tile is None:
        # TODO(synk): tile the D (lane) axis with a two-pass / online softmax for
        # very large out_dim instead of refusing.
        raise ValueError(
            f"ViewPredLoss Pallas kernel: out_dim={D} exceeds the VMEM budget "
            f"({budget_bytes >> 20} MiB) even at {candidates[-1]} rows per tile; "
            f"lane-axis tiling is not implemented.")
    # v7x: make sure both TensorCores get at least 2 row tiles each.
    while (B // tile < min_tiles and tile % 2 == 0
           and tile // 2 >= min_rows and B % (tile // 2) == 0):
        tile //= 2
    return tile


@functools.lru_cache(maxsize=None)
def _build_dino_call(ncrops, B, D, tile_rows, in_itemsize, use_bf16_exp):
    assert B % tile_rows == 0
    num_tiles = B // tile_rows
    kernel = _make_dino_tile_kernel(use_bf16_exp)
    cap = _vmem_capacity_bytes()
    vmem_limit = int(min(max(_vmem_block_estimate(tile_rows, D, in_itemsize),
                             8 << 20),
                         int(0.85 * cap)))
    return pl.pallas_call(
        kernel,
        out_shape=(
            jax.ShapeDtypeStruct((num_tiles, 1, 128), jnp.float32),  # partial CE sums
            jax.ShapeDtypeStruct((num_tiles, 1, D), jnp.float32),    # partial teacher sums
        ),
        grid=(num_tiles, ncrops),
        in_specs=[
            pl.BlockSpec(memory_space=pltpu.MemorySpace.SMEM),             # inv temps
            pl.BlockSpec((None, tile_rows, D), lambda i, v: (v, i, 0)),    # student crop v
            pl.BlockSpec((2, tile_rows, D), lambda i, v: (0, i, 0)),       # teacher (resident over v)
            pl.BlockSpec((1, D), lambda i, v: (0, 0)),                     # center (resident)
        ],
        out_specs=(
            pl.BlockSpec((1, 1, 128), lambda i, v: (i, 0, 0)),
            pl.BlockSpec((1, 1, D), lambda i, v: (i, 0, 0)),
        ),
        scratch_shapes=[pltpu.VMEM((3, tile_rows, D), jnp.float32)],       # q0, q1, q0+q1
        compiler_params=pltpu.CompilerParams(
            dimension_semantics=("parallel", "arbitrary"),  # rows parallel, crops accumulate
            vmem_limit_bytes=vmem_limit,
        ),
    )


# --------------------------------------------------------------------------- #
# Jitted functional core
# --------------------------------------------------------------------------- #
@functools.partial(jax.jit,
                   static_argnames=("ncrops", "tile_rows", "center_momentum",
                                    "use_bf16_exp"))
def _view_pred_loss_fn(student, teacher, center, inv_temps, *,
                       ncrops, tile_rows, center_momentum, use_bf16_exp):
    n_student, D = student.shape
    n_teacher = teacher.shape[0]
    B = n_teacher // 2
    assert n_student == ncrops * B, "student rows must be ncrops * B"
    in_itemsize = int(max(jnp.dtype(student.dtype).itemsize,
                          jnp.dtype(teacher.dtype).itemsize))
    call = _build_dino_call(ncrops, B, D, tile_rows, in_itemsize, use_bf16_exp)

    s3 = student.reshape(ncrops, B, D)   # contiguous, free reshape
    t3 = teacher.reshape(2, B, D)
    loss_part, tsum_part = call(inv_temps, s3, t3, center)

    n_terms = 2 * ncrops - min(ncrops, 2)             # == 2*(ncrops-1) for ncrops >= 2
    loss = jnp.sum(loss_part[:, 0, 0]) / jnp.float32(n_terms * B)

    batch_center = (jnp.sum(tsum_part[:, 0, :], axis=0, keepdims=True)
                    / jnp.float32(n_teacher))                            # (1, D)
    new_center = (center * jnp.float32(center_momentum)
                  + batch_center * jnp.float32(1.0 - center_momentum))
    return loss, new_center


# --------------------------------------------------------------------------- #
# Module wrapper (mirrors the PyTorch nn.Module interface)
# --------------------------------------------------------------------------- #
class ViewPredLoss:
    """JAX / Pallas-TPU port of the PyTorch ViewPredLoss module."""

    def __init__(self, out_dim, ncrops, warmup_teacher_temp, teacher_temp,
                 warmup_teacher_temp_epochs, nepochs, in_channels=3,
                 student_temp=0.1, center_momentum=0.9):
        self.student_temp = float(student_temp)
        self.center_momentum = float(center_momentum)
        self.ncrops = int(ncrops)
        self.in_channels = in_channels
        self.out_dim = int(out_dim)
        # Deterministic buffer init (zeros), same as register_buffer('center', zeros).
        self.center = jnp.zeros((1, out_dim), dtype=jnp.float32)
        self.teacher_temp_schedule = np.concatenate((
            np.linspace(warmup_teacher_temp, teacher_temp, warmup_teacher_temp_epochs),
            np.ones(nepochs - warmup_teacher_temp_epochs) * teacher_temp,
        ))

    def forward(self, student_output, teacher_output, epoch):
        teacher_temp = float(self.teacher_temp_schedule[int(epoch)])
        inv_temps = jnp.array([1.0 / self.student_temp, 1.0 / teacher_temp],
                              dtype=jnp.float32)
        n_teacher = teacher_output.shape[0]
        assert n_teacher % 2 == 0, "teacher_output must hold 2 global crops"
        B = n_teacher // 2
        assert student_output.shape[0] == self.ncrops * B, \
            "student rows must be ncrops * B"
        in_itemsize = int(max(jnp.dtype(student_output.dtype).itemsize,
                              jnp.dtype(teacher_output.dtype).itemsize))
        budget = int(0.75 * _vmem_capacity_bytes())
        tile_rows = int(_choose_tile_rows(B, self.out_dim, in_itemsize,
                                          budget_bytes=budget,
                                          min_tiles=_target_min_row_tiles()))
        loss, new_center = _view_pred_loss_fn(
            student_output, teacher_output, self.center, inv_temps,
            ncrops=self.ncrops, tile_rows=tile_rows,
            center_momentum=self.center_momentum,
            use_bf16_exp=bool(_use_bf16_exp()))
        # TODO(synk): functionalize this buffer update (thread `center` through the
        # train step) when composing with jax.jit / grad; the Python-side state here
        # mirrors the PyTorch register_buffer semantics for standalone use.
        self.center = new_center
        return dict(ce_loss=loss, loss=loss)


# --------------------------------------------------------------------------- #
# Pure-JAX reference (replicates the PyTorch forward) + demo
# --------------------------------------------------------------------------- #
def _reference_forward(student_output, teacher_output, center, ncrops,
                       student_temp, teacher_temp):
    student_out = student_output / student_temp
    student_chunks = jnp.split(student_out, ncrops, axis=0)
    teacher_soft = jax.nn.softmax((teacher_output - center) / teacher_temp, axis=-1)
    teacher_chunks = jnp.split(teacher_soft, 2, axis=0)
    total_loss = 0.0
    n_terms = 0
    for iq, q in enumerate(teacher_chunks):
        for v in range(len(student_chunks)):
            if v == iq:
                continue
            loss = jnp.sum(-q * jax.nn.log_softmax(student_chunks[v], axis=-1), axis=-1)
            total_loss += jnp.mean(loss)
            n_terms += 1
    return total_loss / n_terms


if __name__ == "__main__":
    # Small shapes consistent with the module: out_dim=256, ncrops=8 student crops,
    # 2 teacher (global) crops, per-crop batch B=32.
    out_dim = 256
    ncrops = 8
    B = 32
    epoch = 3

    module = ViewPredLoss(out_dim=out_dim, ncrops=ncrops,
                          warmup_teacher_temp=0.04, teacher_temp=0.07,
                          warmup_teacher_temp_epochs=10, nepochs=100)

    key = jax.random.PRNGKey(0)
    k1, k2 = jax.random.split(key)
    # Native bf16 inputs (as a real DINO head would emit) -> half the DMA bytes.
    student_output = jax.random.normal(k1, (ncrops * B, out_dim)).astype(jnp.bfloat16)
    teacher_output = jax.random.normal(k2, (2 * B, out_dim)).astype(jnp.bfloat16)

    init_center = module.center
    out = module.forward(student_output, teacher_output, epoch)
    jax.block_until_ready(out["loss"])
    jax.block_until_ready(module.center)

    # Sanity check against a pure-JAX f32 reference on the same (bf16) values.
    teacher_temp = float(module.teacher_temp_schedule[epoch])
    s32 = student_output.astype(jnp.float32)
    t32 = teacher_output.astype(jnp.float32)
    ref_loss = _reference_forward(s32, t32, init_center, ncrops,
                                  module.student_temp, teacher_temp)
    ref_center = (init_center * module.center_momentum
                  + (jnp.sum(t32, axis=0, keepdims=True) / t32.shape[0])
                  * (1 - module.center_momentum))
    # bf16 EUP exp (on v6e/v7x) gives ~1e-3-level relative drift vs the f32 reference.
    assert jnp.allclose(out["loss"], ref_loss, rtol=1e-2, atol=1e-2), \
        (out["loss"], ref_loss)
    assert jnp.allclose(module.center, ref_center, rtol=1e-4, atol=1e-5)

    print("KERNEL_OK")
</pallas_src>

<mosaic_0001>
module attributes {stable_mosaic.version = 11 : i64} {
  func.func @kernel(%arg0: i32, %arg1: i32, %arg2: memref<2xf32, #tpu.memory_space<smem>>, %arg3: memref<1x32x256xbf16, #tpu.memory_space<vmem>>, %arg4: memref<2x32x256xbf16, #tpu.memory_space<vmem>>, %arg5: memref<1x256xf32, #tpu.memory_space<vmem>>, %arg6: memref<1x1x128xf32, #tpu.memory_space<vmem>>, %arg7: memref<1x1x256xf32, #tpu.memory_space<vmem>>, %arg8: memref<3x32x256xf32, #tpu.memory_space<vmem>>) attributes {dimension_semantics = [#tpu.dimension_semantics<parallel>, #tpu.dimension_semantics<arbitrary>], iteration_bounds = array<i64: 1, 8>, scalar_prefetch = 0 : i64, scratch_operands = 1 : i64, tpu.core_type = #tpu.core_type<tc>, window_params = [{transform_indices = @transform_0, window_bounds = array<i64: 2>}, {transform_indices = @transform_1, window_bounds = array<i64: 1, 32, 256>}, {transform_indices = @transform_2, window_bounds = array<i64: 2, 32, 256>}, {pipeline_mode = #tpu.pipeline_mode<synchronous>, transform_indices = @transform_3, window_bounds = array<i64: 1, 256>}, {transform_indices = @transform_4, window_bounds = array<i64: 1, 1, 128>}, {transform_indices = @transform_5, window_bounds = array<i64: 1, 1, 256>}]} {
    %c0 = arith.constant 0 : index
    %0 = memref.load %arg2[%c0] : memref<2xf32, #tpu.memory_space<smem>>
    %c1 = arith.constant 1 : index
    %1 = memref.load %arg2[%c1] : memref<2xf32, #tpu.memory_space<smem>>
    %c0_i32 = arith.constant 0 : i32
    %2 = arith.cmpi eq, %arg1, %c0_i32 : i32
    %3 = arith.extui %2 : i1 to i32
    %c0_i32_0 = arith.constant 0 : i32
    %4 = arith.cmpi ne, %3, %c0_i32_0 : i32
    scf.if %4 {
      %c0_18 = arith.constant 0 : index
      %c0_19 = arith.constant 0 : index
      %c0_20 = arith.constant 0 : index
      %38 = vector.load %arg4[%c0_18, %c0_19, %c0_20] : memref<2x32x256xbf16, #tpu.memory_space<vmem>>, vector<2x32x256xbf16>
      %39 = arith.extf %38 : vector<2x32x256xbf16> to vector<2x32x256xf32>
      %c0_21 = arith.constant 0 : index
      %c0_22 = arith.constant 0 : index
      %40 = vector.load %arg5[%c0_21, %c0_22] : memref<1x256xf32, #tpu.memory_space<vmem>>, vector<1x256xf32>
      %41 = vector.shape_cast %40 : vector<1x256xf32> to vector<1x1x256xf32>
      %42 = vector.broadcast %41 : vector<1x1x256xf32> to vector<2x32x256xf32>
      %43 = arith.subf %39, %42 : vector<2x32x256xf32>
      %44 = vector.broadcast %1 : f32 to vector<2x32x256xf32>
      %45 = arith.mulf %43, %44 : vector<2x32x256xf32>
      %cst_23 = arith.constant dense<0xFF800000> : vector<2x32xf32>
      %46 = vector.multi_reduction <maximumf>, %45, %cst_23 [2] : vector<2x32x256xf32> to vector<2x32xf32>
      %47 = vector.shape_cast %46 : vector<2x32xf32> to vector<2x32x1xf32>
      %48 = vector.broadcast %47 : vector<2x32x1xf32> to vector<2x32x256xf32>
      %49 = arith.subf %45, %48 : vector<2x32x256xf32>
      %50 = math.exp %49 : vector<2x32x256xf32>
      %cst_24 = arith.constant dense<0.000000e+00> : vector<2x32xf32>
      %51 = vector.multi_reduction <add>, %50, %cst_24 [2] : vector<2x32x256xf32> to vector<2x32xf32>
      %52 = vector.shape_cast %51 : vector<2x32xf32> to vector<2x32x1xf32>
      %cst_25 = arith.constant 1.000000e+00 : f32
      %53 = vector.broadcast %cst_25 : f32 to vector<2x32x1xf32>
      %54 = arith.divf %53, %52 : vector<2x32x1xf32>
      %55 = vector.broadcast %54 : vector<2x32x1xf32> to vector<2x32x256xf32>
      %56 = arith.mulf %50, %55 : vector<2x32x256xf32>
      %57 = vector.extract_strided_slice %56 {offsets = [0, 0, 0], sizes = [1, 32, 256], strides = [1, 1, 1]} : vector<2x32x256xf32> to vector<1x32x256xf32>
      %58 = vector.shape_cast %57 : vector<1x32x256xf32> to vector<32x256xf32>
      %c0_26 = arith.constant 0 : index
      %c0_27 = arith.constant 0 : index
      %c0_28 = arith.constant 0 : index
      %59 = vector.load %arg8[%c0_26, %c0_27, %c0_28] : memref<3x32x256xf32, #tpu.memory_space<vmem>>, vector<1x32x256xf32>
      %60 = vector.shape_cast %59 : vector<1x32x256xf32> to vector<32x256xf32>
      %61 = vector.shape_cast %58 : vector<32x256xf32> to vector<1x32x256xf32>
      tpu.vector_store %arg8[%c0_26, %c0_27, %c0_28], %61 {strides = array<i32>} : memref<3x32x256xf32, #tpu.memory_space<vmem>>, vector<1x32x256xf32>,
      %62 = vector.extract_strided_slice %56 {offsets = [1, 0, 0], sizes = [1, 32, 256], strides = [1, 1, 1]} : vector<2x32x256xf32> to vector<1x32x256xf32>
      %63 = vector.shape_cast %62 : vector<1x32x256xf32> to vector<32x256xf32>
      %c1_29 = arith.constant 1 : index
      %c0_30 = arith.constant 0 : index
      %c0_31 = arith.constant 0 : index
      %64 = vector.load %arg8[%c1_29, %c0_30, %c0_31] : memref<3x32x256xf32, #tpu.memory_space<vmem>>, vector<1x32x256xf32>
      %65 = vector.shape_cast %64 : vector<1x32x256xf32> to vector<32x256xf32>
      %66 = vector.shape_cast %63 : vector<32x256xf32> to vector<1x32x256xf32>
      tpu.vector_store %arg8[%c1_29, %c0_30, %c0_31], %66 {strides = array<i32>} : memref<3x32x256xf32, #tpu.memory_space<vmem>>, vector<1x32x256xf32>,
      %67 = vector.extract_strided_slice %56 {offsets = [0, 0, 0], sizes = [1, 32, 256], strides = [1, 1, 1]} : vector<2x32x256xf32> to vector<1x32x256xf32>
      %68 = vector.shape_cast %67 : vector<1x32x256xf32> to vector<32x256xf32>
      %69 = vector.extract_strided_slice %56 {offsets = [1, 0, 0], sizes = [1, 32, 256], strides = [1, 1, 1]} : vector<2x32x256xf32> to vector<1x32x256xf32>
      %70 = vector.shape_cast %69 : vector<1x32x256xf32> to vector<32x256xf32>
      %71 = arith.addf %68, %70 : vector<32x256xf32>
      %c2 = arith.constant 2 : index
      %c0_32 = arith.constant 0 : index
      %c0_33 = arith.constant 0 : index
      %72 = vector.load %arg8[%c2, %c0_32, %c0_33] : memref<3x32x256xf32, #tpu.memory_space<vmem>>, vector<1x32x256xf32>
      %73 = vector.shape_cast %72 : vector<1x32x256xf32> to vector<32x256xf32>
      %74 = vector.shape_cast %71 : vector<32x256xf32> to vector<1x32x256xf32>
      tpu.vector_store %arg8[%c2, %c0_32, %c0_33], %74 {strides = array<i32>} : memref<3x32x256xf32, #tpu.memory_space<vmem>>, vector<1x32x256xf32>,
      %cst_34 = arith.constant dense<0.000000e+00> : vector<256xf32>
      %75 = vector.multi_reduction <add>, %39, %cst_34 [0, 1] : vector<2x32x256xf32> to vector<256xf32>
      %76 = vector.shape_cast %75 : vector<256xf32> to vector<1x1x256xf32>
      %c0_35 = arith.constant 0 : index
      %c0_36 = arith.constant 0 : index
      %c0_37 = arith.constant 0 : index
      %77 = vector.load %arg7[%c0_35, %c0_36, %c0_37] : memref<1x1x256xf32, #tpu.memory_space<vmem>>, vector<1x1x256xf32>
      tpu.vector_store %arg7[%c0_35, %c0_36, %c0_37], %76 {strides = array<i32>} : memref<1x1x256xf32, #tpu.memory_space<vmem>>, vector<1x1x256xf32>,
      %cst_38 = arith.constant 0.000000e+00 : f32
      %78 = vector.broadcast %cst_38 : f32 to vector<1x1x128xf32>
      %c0_39 = arith.constant 0 : index
      %c0_40 = arith.constant 0 : index
      %c0_41 = arith.constant 0 : index
      %79 = vector.load %arg6[%c0_39, %c0_40, %c0_41] : memref<1x1x128xf32, #tpu.memory_space<vmem>>, vector<1x1x128xf32>
      tpu.vector_store %arg6[%c0_39, %c0_40, %c0_41], %78 {strides = array<i32>} : memref<1x1x128xf32, #tpu.memory_space<vmem>>, vector<1x1x128xf32>,
    } else {
    }
    %c0_1 = arith.constant 0 : index
    %c0_2 = arith.constant 0 : index
    %c0_3 = arith.constant 0 : index
    %5 = vector.load %arg3[%c0_1, %c0_2, %c0_3] : memref<1x32x256xbf16, #tpu.memory_space<vmem>>, vector<1x32x256xbf16>
    %6 = vector.shape_cast %5 : vector<1x32x256xbf16> to vector<32x256xbf16>
    %cst = arith.constant dense<0xFF80> : vector<32xbf16>
    %7 = vector.multi_reduction <maximumf>, %6, %cst [1] : vector<32x256xbf16> to vector<32xbf16>
    %8 = vector.shape_cast %7 : vector<32xbf16> to vector<32x1xbf16>
    %9 = arith.extf %8 : vector<32x1xbf16> to vector<32x1xf32>
    %10 = arith.extf %6 : vector<32x256xbf16> to vector<32x256xf32>
    %11 = vector.broadcast %9 : vector<32x1xf32> to vector<32x256xf32>
    %12 = arith.subf %10, %11 : vector<32x256xf32>
    %13 = vector.broadcast %0 : f32 to vector<32x256xf32>
    %14 = arith.mulf %12, %13 : vector<32x256xf32>
    %15 = math.exp %14 : vector<32x256xf32>
    %cst_4 = arith.constant dense<0.000000e+00> : vector<32xf32>
    %16 = vector.multi_reduction <add>, %15, %cst_4 [1] : vector<32x256xf32> to vector<32xf32>
    %17 = vector.shape_cast %16 : vector<32xf32> to vector<32x1xf32>
    %18 = math.log %17 : vector<32x1xf32>
    %19 = vector.broadcast %18 : vector<32x1xf32> to vector<32x256xf32>
    %20 = arith.subf %14, %19 : vector<32x256xf32>
    %c0_i32_5 = arith.constant 0 : i32
    %21 = arith.cmpi eq, %arg1, %c0_i32_5 : i32
    %c1_i32 = arith.constant 1 : i32
    %22 = arith.cmpi eq, %arg1, %c1_i32 : i32
    %c0_i32_6 = arith.constant 0 : i32
    %c2_i32 = arith.constant 2 : i32
    %23 = arith.select %22, %c0_i32_6, %c2_i32 : i32
    %c1_i32_7 = arith.constant 1 : i32
    %24 = arith.select %21, %c1_i32_7, %23 : i32
    %25 = arith.index_cast %24 : i32 to index
    %c0_8 = arith.constant 0 : index
    %c0_9 = arith.constant 0 : index
    %26 = vector.load %arg8[%25, %c0_8, %c0_9] : memref<3x32x256xf32, #tpu.memory_space<vmem>>, vector<1x32x256xf32>
    %27 = vector.shape_cast %26 : vector<1x32x256xf32> to vector<32x256xf32>
    %28 = arith.mulf %27, %20 : vector<32x256xf32>
    %29 = vector.shape_cast %28 : vector<32x256xf32> to vector<1x32x256xf32>
    %cst_10 = arith.constant dense<0.000000e+00> : vector<1xf32>
    %30 = vector.multi_reduction <add>, %29, %cst_10 [1, 2] : vector<1x32x256xf32> to vector<1xf32>
    %31 = vector.shape_cast %30 : vector<1xf32> to vector<1x1x1xf32>
    %32 = vector.extract %31[0, 0, 0] : f32 from vector<1x1x1xf32>
    %cst_11 = arith.constant 0.000000e+00 : f32
    %33 = arith.subf %cst_11, %32 : f32
    %c0_12 = arith.constant 0 : index
    %c0_13 = arith.constant 0 : index
    %c0_14 = arith.constant 0 : index
    %34 = vector.load %arg6[%c0_12, %c0_13, %c0_14] : memref<1x1x128xf32, #tpu.memory_space<vmem>>, vector<1x1x128xf32>
    %35 = vector.broadcast %33 : f32 to vector<1x1x128xf32>
    %36 = arith.addf %34, %35 : vector<1x1x128xf32>
    %c0_15 = arith.constant 0 : index
    %c0_16 = arith.constant 0 : index
    %c0_17 = arith.constant 0 : index
    %37 = vector.load %arg6[%c0_15, %c0_16, %c0_17] : memref<1x1x128xf32, #tpu.memory_space<vmem>>, vector<1x1x128xf32>
    tpu.vector_store %arg6[%c0_15, %c0_16, %c0_17], %36 {strides = array<i32>} : memref<1x1x128xf32, #tpu.memory_space<vmem>>, vector<1x1x128xf32>,
    return
  }
  func.func @transform_0(%arg0: i32, %arg1: i32) -> i32 {
    %c0_i32 = arith.constant 0 : i32
    %c0_i32_0 = arith.constant 0 : i32
    return %c0_i32 : i32
  }
  func.func @transform_1(%arg0: i32, %arg1: i32) -> (i32, i32, i32) {
    %c0_i32 = arith.constant 0 : i32
    %c0_i32_0 = arith.constant 0 : i32
    return %arg1, %arg0, %c0_i32 : i32, i32, i32
  }
  func.func @transform_2(%arg0: i32, %arg1: i32) -> (i32, i32, i32) {
    %c0_i32 = arith.constant 0 : i32
    %c0_i32_0 = arith.constant 0 : i32
    %c0_i32_1 = arith.constant 0 : i32
    return %c0_i32, %arg0, %c0_i32_0 : i32, i32, i32
  }
  func.func @transform_3(%arg0: i32, %arg1: i32) -> (i32, i32) {
    %c0_i32 = arith.constant 0 : i32
    %c0_i32_0 = arith.constant 0 : i32
    %c0_i32_1 = arith.constant 0 : i32
    return %c0_i32, %c0_i32_0 : i32, i32
  }
  func.func @transform_4(%arg0: i32, %arg1: i32) -> (i32, i32, i32) {
    %c0_i32 = arith.constant 0 : i32
    %c0_i32_0 = arith.constant 0 : i32
    %c0_i32_1 = arith.constant 0 : i32
    return %arg0, %c0_i32, %c0_i32_0 : i32, i32, i32
  }
  func.func @transform_5(%arg0: i32, %arg1: i32) -> (i32, i32, i32) {
    %c0_i32 = arith.constant 0 : i32
    %c0_i32_0 = arith.constant 0 : i32
    %c0_i32_1 = arith.constant 0 : i32
    return %arg0, %c0_i32, %c0_i32_0 : i32, i32, i32
  }
}

</mosaic_0001>

<llo_original>
// kernel: _view_pred_loss_fn.1
$region0: #{_view_pred_loss_fn.1}
  #allocation0 [shape = 'u32[]', space=smem, size = 0x4, offset = 0x4, fixed_abs, tag = 'smem constant byte address 0x4 - core index']
  #allocation1 [shape = 'u32[144,128]{1,0:T(1,128)}', space=vmem, size = 0x12000, scoped, tag = 'internal scratch']
  #allocation2 [shape = 'f32[3,32,256]{2,1,0:T(8,128)}', space=vmem, size = 0x18000, scoped, tag = 'scratch operand']
  %s0 = inlined_call_operand.vmem [shape: f32[2], index: 0, kind: input, shape index: {}]
  %s1 = inlined_call_operand.hbm [shape: bf16[8,32,256], index: 1, kind: input, shape index: {}]
  %s2 = inlined_call_operand.hbm [shape: bf16[2,32,256], index: 2, kind: input, shape index: {}]
  %s3 = inlined_call_operand.vmem [shape: f32[1,256], index: 3, kind: input, shape index: {}]
  %s4 = inlined_call_operand.vmem [shape: f32[1,1,128], index: 4, kind: output, shape index: {0}]
  %s5 = inlined_call_operand.vmem [shape: f32[1,1,256], index: 5, kind: output, shape index: {1}]
  %6 = xla_tuple %s4, %s5
  %s7 = sld [smem:[#allocation0]]
  $region73: #{_view_pred_loss_fn.1} parent=0
    _
  %s9 = ssub.s32 1, %s7
  %s10 = scalar_select 0, %s9, %s7
  $region1: #{_view_pred_loss_fn.1} parent=0
    #allocation3 [shape = 'u8[512]{0}', space=smem, size = 0x200, scoped, tag = 'input window, operand 0, single buffered']
    #allocation4 [shape = 's32[2]{0}', space=sflag, size = 0x8, scoped, tag = 'scoped memory for _view_pred_loss_fn.1']
    #allocation5 [shape = 's32[2]{0}', space=sflag, size = 0x8, scoped, tag = 'scoped memory for _view_pred_loss_fn.1']
    #allocation6 [shape = 'u8[32768]{0}', space=vmem, size = 0x8000, scoped, tag = 'input window, operand 1']
    #allocation7 [shape = 'u8[32768]{0}', space=vmem, size = 0x8000, scoped, tag = 'input window, operand 2, single buffered']
    #allocation8 [shape = 's32[1]{0}', space=sflag, size = 0x4, scoped, tag = 'scoped memory for _view_pred_loss_fn.1']
    %11 = vsyncpa [#allocation5], 0
    %12 = vsyncpa [#allocation4], 0
    %s13 = scalar_lea.sflag [#allocation4], 1
    %14 = vsyncpa %s13, 0
    %15 = vsyncpa [#allocation8], 0
    loop: start=0, step=1, limit=10
    $region2: #{_view_pred_loss_fn.1} parent=1 // loop_pre_header
      _
    $region3: #{_view_pred_loss_fn.1} parent=1 // loop_header
      %s17 = sphi 0, %s21
      %p18 = scmp.ge.s32.totalorder %s17, 10
      %s24 = sphi 0, %s36
      %s25 = sphi 0, %s32
      %s26 = sphi 0, %s24
      %s27 = sphi 0, %s25
      %s28 = sphi 0, %s26
      %s29 = sphi 0, %s27
      %s37 = sphi 0, %s37
      %s39 = sphi 0, %s37
      %s40 = sphi 0, %s39
      %s54 = sphi 0, %s40
      %s62 = sphi 0, %s64
      %s65 = sphi 0, %s62
      %s66 = sphi 0, %s65
      %s82 = sphi 0, %s66
      %s88 = sphi 0, %s90
      %s91 = sphi 0, %s88
      %s92 = sphi 0, %s91
      %s108 = sphi 0, %s92
      %s112 = sphi 0, %s112
      %s114 = sphi 0, %s112
      %s115 = sphi 0, %s114
      %s129 = sphi 0, %s115
      %s135 = sphi 0, %s137
      %s138 = sphi 0, %s135
      %s139 = sphi 0, %s138
      %s155 = sphi 0, %s139
      %s161 = sphi 0, %s163
      %s164 = sphi 0, %s161
      %s165 = sphi 0, %s164
      %s181 = sphi 0, %s165
    $region4: #{_view_pred_loss_fn.1} parent=1 // loop_header_branch
      %20 = sbr.rel (%p18) target = $region8
    $region5: #{_view_pred_loss_fn.1} parent=1 // loop_body
      %s22 = ssub.s32 %s17, 1
      %s23 = ssub.s32 %s17, 2
      %s30 = sadd.s32 1, %s25
      %p31 = scmp.ge.s32.totalorder %s30, 8
      %s32 = scalar_select %p31, 0, %s30
      %s33 = sadd.s32 1, %s24
      %s34 = scalar_select %p31, %s33, %s24
      %p35 = scmp.ge.s32.totalorder %s34, 1
      %s36 = scalar_select %p35, 0, %s34
      %s38 = sadd.s32 %s37, 1
      %p41 = scmp.eq.s32.totalorder %s17, 7
      %p42 = scmp.ne.s32.totalorder %s37, %s39
      %p43 = scmp.eq.s32.totalorder %s17, 0
      %p44 = por %p42, %p43
      %p45 = scmp.ne.s32.totalorder %s37, %s39
      %p46 = scmp.eq.s32.totalorder %s22, 7
      %p47 = por %p45, %p46
      %p48 = scmp.ne.s32.totalorder %s39, %s40
      %p49 = scmp.eq.s32.totalorder %s22, 0
      %p50 = por %p48, %p49
      %p51 = scmp.ne.s32.totalorder %s39, %s40
      %p52 = scmp.eq.s32.totalorder %s23, 7
      %p53 = por %p51, %p52
      %p55 = scmp.ne.s32.totalorder %s40, %s54
      %p56 = scmp.eq.s32.totalorder %s23, 0
      %p57 = por %p55, %p56
      %s58 = ssub.s32 %s25, %s32
      %s59 = ssub.s32 %s24, %s36
      %s60 = sor.u32 %s58, %s59
      %p61 = scmp.eq.s32.totalorder %s60, 0
      %s63 = sadd.s32 %s62, 1
      %s64 = scalar_select %p61, %s62, %s63
      %p67 = pneg %p61
      %p68 = scmp.eq.s32.totalorder %s17, 7
      %p69 = por %p67, %p68
      %p70 = scmp.ne.s32.totalorder %s62, %s65
      %p71 = scmp.eq.s32.totalorder %s17, 0
      %p72 = por %p70, %p71
      %p73 = scmp.ne.s32.totalorder %s62, %s65
      %p74 = scmp.eq.s32.totalorder %s22, 7
      %p75 = por %p73, %p74
      %p76 = scmp.ne.s32.totalorder %s65, %s66
      %p77 = scmp.eq.s32.totalorder %s22, 0
      %p78 = por %p76, %p77
      %p79 = scmp.ne.s32.totalorder %s65, %s66
      %p80 = scmp.eq.s32.totalorder %s23, 7
      %p81 = por %p79, %p80
      %p83 = scmp.ne.s32.totalorder %s66, %s82
      %p84 = scmp.eq.s32.totalorder %s23, 0
      %p85 = por %p83, %p84
      %s86 = ssub.s32 %s24, %s36
      %p87 = scmp.eq.s32.totalorder %s86, 0
      %s89 = sadd.s32 %s88, 1
      %s90 = scalar_select %p87, %s88, %s89
      %p93 = pneg %p87
      %p94 = scmp.eq.s32.totalorder %s17, 7
      %p95 = por %p93, %p94
      %p96 = scmp.ne.s32.totalorder %s88, %s91
      %p97 = scmp.eq.s32.totalorder %s17, 0
      %p98 = por %p96, %p97
      %p99 = scmp.ne.s32.totalorder %s88, %s91
      %p100 = scmp.eq.s32.totalorder %s22, 7
      %p101 = por %p99, %p100
      %p102 = scmp.ne.s32.totalorder %s91, %s92
      %p103 = scmp.eq.s32.totalorder %s22, 0
      %p104 = por %p102, %p103
      %p105 = scmp.ne.s32.totalorder %s91, %s92
      %p106 = scmp.eq.s32.totalorder %s23, 7
      %p107 = por %p105, %p106
      %p109 = scmp.ne.s32.totalorder %s92, %s108
      %p110 = scmp.eq.s32.totalorder %s23, 0
      %p111 = por %p109, %p110
      %s113 = sadd.s32 %s112, 1
      %p116 = scmp.eq.s32.totalorder %s17, 7
      %p117 = scmp.ne.s32.totalorder %s112, %s114
      %p118 = scmp.eq.s32.totalorder %s17, 0
      %p119 = por %p117, %p118
      %p120 = scmp.ne.s32.totalorder %s112, %s114
      %p121 = scmp.eq.s32.totalorder %s22, 7
      %p122 = por %p120, %p121
      %p123 = scmp.ne.s32.totalorder %s114, %s115
      %p124 = scmp.eq.s32.totalorder %s22, 0
      %p125 = por %p123, %p124
      %p126 = scmp.ne.s32.totalorder %s114, %s115
      %p127 = scmp.eq.s32.totalorder %s23, 7
      %p128 = por %p126, %p127
      %p130 = scmp.ne.s32.totalorder %s115, %s129
      %p131 = scmp.eq.s32.totalorder %s23, 0
      %p132 = por %p130, %p131
      %s133 = ssub.s32 %s24, %s36
      %p134 = scmp.eq.s32.totalorder %s133, 0
      %s136 = sadd.s32 %s135, 1
      %s137 = scalar_select %p134, %s135, %s136
      %p140 = pneg %p134
      %p141 = scmp.eq.s32.totalorder %s17, 7
      %p142 = por %p140, %p141
      %p143 = scmp.ne.s32.totalorder %s135, %s138
      %p144 = scmp.eq.s32.totalorder %s17, 0
      %p145 = por %p143, %p144
      %p146 = scmp.ne.s32.totalorder %s135, %s138
      %p147 = scmp.eq.s32.totalorder %s22, 7
      %p148 = por %p146, %p147
      %p149 = scmp.ne.s32.totalorder %s138, %s139
      %p150 = scmp.eq.s32.totalorder %s22, 0
      %p151 = por %p149, %p150
      %p152 = scmp.ne.s32.totalorder %s138, %s139
      %p153 = scmp.eq.s32.totalorder %s23, 7
      %p154 = por %p152, %p153
      %p156 = scmp.ne.s32.totalorder %s139, %s155
      %p157 = scmp.eq.s32.totalorder %s23, 0
      %p158 = por %p156, %p157
      %s159 = ssub.s32 %s24, %s36
      %p160 = scmp.eq.s32.totalorder %s159, 0
      %s162 = sadd.s32 %s161, 1
      %s163 = scalar_select %p160, %s161, %s162
      %p166 = pneg %p160
      %p167 = scmp.eq.s32.totalorder %s17, 7
      %p168 = por %p166, %p167
      %p169 = scmp.ne.s32.totalorder %s161, %s164
      %p170 = scmp.eq.s32.totalorder %s17, 0
      %p171 = por %p169, %p170
      %p172 = scmp.ne.s32.totalorder %s161, %s164
      %p173 = scmp.eq.s32.totalorder %s22, 7
      %p174 = por %p172, %p173
      %p175 = scmp.ne.s32.totalorder %s164, %s165
      %p176 = scmp.eq.s32.totalorder %s22, 0
      %p177 = por %p175, %p176
      %p178 = scmp.ne.s32.totalorder %s164, %s165
      %p179 = scmp.eq.s32.totalorder %s23, 7
      %p180 = por %p178, %p179
      %p182 = scmp.ne.s32.totalorder %s165, %s181
      %p183 = scmp.eq.s32.totalorder %s23, 0
      %p184 = por %p182, %p183
      %p185 = scmp.le.s32.totalorder 1, %s17
      %p186 = scmp.lt.s32.totalorder %s17, 9
      %p187 = pnand %p185, %p186
      %p188 = pneg %p187
      // Predicated region
      $region9: #{_view_pred_loss_fn.1} parent=5 // pred_check
        _
      $region10: #{_view_pred_loss_fn.1} parent=5 // pred_check_branch
        %190 = sbr.rel (%p187) target = $region12
      $region11: #{_view_pred_loss_fn.1} parent=5 // pred_region
        %s191 = ssub.s32 %s17, 1
        // Predicated region
        $region13: #{_view_pred_loss_fn.1} parent=11 // pred_check
          %p192 = pneg %p50
        $region14: #{_view_pred_loss_fn.1} parent=11 // pred_check_branch
          %194 = sbr.rel (%p192) target = $region16
        $region15: #{_view_pred_loss_fn.1} parent=11 // pred_region
          %s196 = ssub.s32 16, 16
          %197 = vsyncadd [#allocation5], %s196
          %s199 = sshll.u32 %s0, 4
          %s200 = int_to_ptr.vmem [resolvable:$true] %s199
          %202 = dma.vmem_to_smem %s200, 16, [#allocation3], [#allocation5]
        $region16: #{_view_pred_loss_fn.1} parent=11 // pred_fallthru
          _
        // Predicated region
        $region17: #{_view_pred_loss_fn.1} parent=11 // pred_check
          %p203 = pneg %p104
        $region18: #{_view_pred_loss_fn.1} parent=11 // pred_check_branch
          %205 = sbr.rel (%p203) target = $region20
        $region19: #{_view_pred_loss_fn.1} parent=11 // pred_region
          %s206 = smul.u32 4, %s26
          %s208 = ssub.s32 1024, 1024
          %209 = vsyncadd [#allocation8], %s208
          %s210 = smul.addr %s206, 2
          %s211 = smul.addr %s210, 64
          %s212 = scalar_lea.hbm %s2, %s211
          %s213 = sshll.u32 [#allocation7], 4
          %s214 = int_to_ptr.vmem [resolvable:$true] %s213
          %219 = dma.hbm_to_vmem [thread:$0]  %s212, 1024, %s214, [#allocation8], 128, 128, 8
        $region20: #{_view_pred_loss_fn.1} parent=11 // pred_fallthru
          _
        // Predicated region
        $region21: #{_view_pred_loss_fn.1} parent=11 // pred_check
          %p220 = pneg %p125
        $region22: #{_view_pred_loss_fn.1} parent=11 // pred_check_branch
          %222 = sbr.rel (%p220) target = $region24
        $region23: #{_view_pred_loss_fn.1} parent=11 // pred_region
          _
        $region24: #{_view_pred_loss_fn.1} parent=11 // pred_fallthru
          _
      $region12: #{_view_pred_loss_fn.1} parent=5 // pred_fallthru
        _
      %p223 = scmp.lt.s32.totalorder %s17, 8
      // Predicated region
      $region25: #{_view_pred_loss_fn.1} parent=5 // pred_check
        %p224 = pneg %p223
      $region26: #{_view_pred_loss_fn.1} parent=5 // pred_check_branch
        %226 = sbr.rel (%p224) target = $region28
      $region27: #{_view_pred_loss_fn.1} parent=5 // pred_region
        // Predicated region
        $region29: #{_view_pred_loss_fn.1} parent=27 // pred_check
          %p227 = pneg %p72
        $region30: #{_view_pred_loss_fn.1} parent=27 // pred_check_branch
          %229 = sbr.rel (%p227) target = $region32
        $region31: #{_view_pred_loss_fn.1} parent=27 // pred_region
          %s230 = sand.u32 %s62, 1
          %s231 = scalar_lea.sflag [#allocation4], %s230
          %s232 = sand.u32 %s62, 1
          %s233 = smul.addr %s232, 32
          %s234 = scalar_lea.vmem [#allocation6], %s233
          %s235 = smul.u32 4, %s24
          %s237 = ssub.s32 512, 512
          %238 = vsyncadd %s231, %s237
          %s239 = smul.addr %s235, 2
          %s240 = smul.addr %s25, 8
          %s241 = sadd.s32 %s239, %s240
          %s242 = smul.addr %s241, 64
          %s243 = scalar_lea.hbm %s1, %s242
          %s244 = sshll.u32 %s234, 4
          %s245 = int_to_ptr.vmem [resolvable:$true] %s244
          %250 = dma.hbm_to_vmem [thread:$0]  %s243, 512, %s245, %s231, 128, 128, 8
        $region32: #{_view_pred_loss_fn.1} parent=27 // pred_fallthru
          _
      $region28: #{_view_pred_loss_fn.1} parent=5 // pred_fallthru
        _
      %p251 = scmp.le.s32.totalorder 1, %s17
      %p252 = scmp.lt.s32.totalorder %s17, 9
      %p253 = pnand %p251, %p252
      %p254 = pneg %p253
      // Predicated region
      $region33: #{_view_pred_loss_fn.1} parent=5 // pred_check
        _
      $region34: #{_view_pred_loss_fn.1} parent=5 // pred_check_branch
        %256 = sbr.rel (%p253) target = $region36
      $region35: #{_view_pred_loss_fn.1} parent=5 // pred_region
        %s257 = ssub.s32 %s17, 1
        // Predicated region
        $region37: #{_view_pred_loss_fn.1} parent=35 // pred_check
          %p258 = pneg %p50
        $region38: #{_view_pred_loss_fn.1} parent=35 // pred_check_branch
          %260 = sbr.rel (%p258) target = $region40
        $region39: #{_view_pred_loss_fn.1} parent=35 // pred_region
          %261 = dma.done [#allocation5], 16
        $region40: #{_view_pred_loss_fn.1} parent=35 // pred_fallthru
          _
        %s262 = sand.u32 %s65, 1
        %s263 = scalar_lea.sflag [#allocation4], %s262
        %s264 = sand.u32 %s65, 1
        %s265 = smul.addr %s264, 32
        %s266 = scalar_lea.vmem [#allocation6], %s265
        // Predicated region
        $region41: #{_view_pred_loss_fn.1} parent=35 // pred_check
          %p267 = pneg %p78
        $region42: #{_view_pred_loss_fn.1} parent=35 // pred_check_branch
          %269 = sbr.rel (%p267) target = $region44
        $region43: #{_view_pred_loss_fn.1} parent=35 // pred_region
          %270 = dma.done %s263, 512
        $region44: #{_view_pred_loss_fn.1} parent=35 // pred_fallthru
          _
        // Predicated region
        $region45: #{_view_pred_loss_fn.1} parent=35 // pred_check
          %p271 = pneg %p104
        $region46: #{_view_pred_loss_fn.1} parent=35 // pred_check_branch
          %273 = sbr.rel (%p271) target = $region48
        $region47: #{_view_pred_loss_fn.1} parent=35 // pred_region
          %274 = dma.done [#allocation8], 1024
        $region48: #{_view_pred_loss_fn.1} parent=35 // pred_fallthru
          _
        %275 = sfence
        %p276 = pneg %p50
        %p277 = pneg %p47
        %s278 = sand.u32 %s65, 1
        %s279 = scalar_lea.sflag [#allocation4], %s278
        %s280 = sand.u32 %s65, 1
        %s281 = smul.addr %s280, 32
        %s282 = scalar_lea.vmem [#allocation6], %s281
        %p283 = pneg %p78
        %p284 = pneg %p75
        %p285 = pneg %p104
        %p286 = pneg %p101
        %p287 = pneg %p125
        %p288 = pneg %p122
        %p289 = pneg %p151
        %p290 = pneg %p148
        %p291 = scmp.lt.s32.totalorder %s26, 0
        %s292 = scalar_select %p291, %s26, 0
        %s293 = scalar_lea.vmem %s4, %s292
        %p294 = pneg %p177
        %p295 = pneg %p174
        %p296 = scmp.lt.s32.totalorder %s26, 0
        %s297 = scalar_select %p296, %s26, 0
        %s298 = smul.addr %s297, 2
        %s299 = scalar_lea.vmem %s5, %s298
        %s300 = smul.u32 4, %s26
        %s301 = smul.u32 4, %s26
        %p302 = scmp.lt.s32.totalorder %s26, 0
        %s303 = scalar_select %p302, %s26, 0
        %s304 = scalar_lea.vmem %s4, %s303
        %p305 = scmp.lt.s32.totalorder %s26, 0
        %s306 = scalar_select %p305, %s26, 0
        %s307 = smul.addr %s306, 2
        %s308 = scalar_lea.vmem %s5, %s307
        %s309 = sld [smem:[#allocation3]]
        %s310 = sld [smem:[#allocation3 + $0x1]]
        %p311 = scmp.eq.s32.totalorder %s27, 0
        // Predicated region
        $region49: #{_view_pred_loss_fn.1} parent=35 // pred_check
          %p312 = pneg %p311
        $region50: #{_view_pred_loss_fn.1} parent=35 // pred_check_branch
          %314 = sbr.rel (%p312) target = $region52
        $region51: #{_view_pred_loss_fn.1} parent=35 // pred_region
          %v315 = vld [vmem:[#allocation7] sm:$0xff]
          %v316 = vld [vmem:[#allocation7 + $0x8] sm:$0xff]
          %v317 = vld [vmem:[#allocation7 + $0x10] sm:$0xff]
          %v318 = vld [vmem:[#allocation7 + $0x18] sm:$0xff]
          %v319 = vld [vmem:[#allocation7 + $0x20] sm:$0xff]
          %v320 = vld [vmem:[#allocation7 + $0x28] sm:$0xff]
          %v321 = vld [vmem:[#allocation7 + $0x30] sm:$0xff]
          %v322 = vld [vmem:[#allocation7 + $0x38] sm:$0xff]
          %v323 = vunpack.c.l.bf16 %v315
          %v324 = vunpack.c.h.bf16 %v315
          %v325 = vunpack.c.l.bf16 %v316
          %v326 = vunpack.c.h.bf16 %v316
          %v327 = vunpack.c.l.bf16 %v317
          %v328 = vunpack.c.h.bf16 %v317
          %v329 = vunpack.c.l.bf16 %v318
          %v330 = vunpack.c.h.bf16 %v318
          %v331 = vunpack.c.l.bf16 %v319
          %v332 = vunpack.c.h.bf16 %v319
          %v333 = vunpack.c.l.bf16 %v320
          %v334 = vunpack.c.h.bf16 %v320
          %v335 = vunpack.c.l.bf16 %v321
          %v336 = vunpack.c.h.bf16 %v321
          %v337 = vunpack.c.l.bf16 %v322
          %v338 = vunpack.c.h.bf16 %v322
          %v339 = vld [vmem:[%s3] sm:$0x3]
          %v341 = vlaneseq
          %v342 = vshrl.u32 %v341, 7
          %v343 = vsub.s32 0, %v342
          %v344 = vrot.slane %v339, %v343
          %v345 = vlaneseq
          %v346 = vshrl.u32 %v345, 7
          %v347 = vsub.s32 1, %v346
          %v348 = vrot.slane %v339, %v347
          %v351 = vsub.f32 %v323, %v344
          %v352 = vsub.f32 %v324, %v348
          %v353 = vsub.f32 %v325, %v344
          %v354 = vsub.f32 %v326, %v348
          %v355 = vsub.f32 %v327, %v344
          %v356 = vsub.f32 %v328, %v348
          %v357 = vsub.f32 %v329, %v344
          %v358 = vsub.f32 %v330, %v348
          %v359 = vsub.f32 %v331, %v344
          %v360 = vsub.f32 %v332, %v348
          %v361 = vsub.f32 %v333, %v344
          %v362 = vsub.f32 %v334, %v348
          %v363 = vsub.f32 %v335, %v344
          %v364 = vsub.f32 %v336, %v348
          %v365 = vsub.f32 %v337, %v344
          %v366 = vsub.f32 %v338, %v348
          %v367 = vstv %s310
          %v368 = vmul.f32 %v351, %v367
          %v369 = vmul.f32 %v352, %v367
          %v370 = vmul.f32 %v353, %v367
          %v371 = vmul.f32 %v354, %v367
          %v372 = vmul.f32 %v355, %v367
          %v373 = vmul.f32 %v356, %v367
          %v374 = vmul.f32 %v357, %v367
          %v375 = vmul.f32 %v358, %v367
          %v376 = vmul.f32 %v359, %v367
          %v377 = vmul.f32 %v360, %v367
          %v378 = vmul.f32 %v361, %v367
          %v379 = vmul.f32 %v362, %v367
          %v380 = vmul.f32 %v363, %v367
          %v381 = vmul.f32 %v364, %v367
          %v382 = vmul.f32 %v365, %v367
          %v383 = vmul.f32 %v366, %v367
          %v384 = vmax.f32 %v368, %v369
          %385 = vmax.xlane.f32.xlu0 %v384
          %v386 = vpop.xlane.xlu0 %385
          %v387 = vmax.f32 %v370, %v371
          %388 = vmax.xlane.f32.xlu0 %v387
          %v389 = vpop.xlane.xlu0 %388
          %v390 = vmax.f32 %v372, %v373
          %391 = vmax.xlane.f32.xlu0 %v390
          %v392 = vpop.xlane.xlu0 %391
          %v393 = vmax.f32 %v374, %v375
          %394 = vmax.xlane.f32.xlu0 %v393
          %v395 = vpop.xlane.xlu0 %394
          %v396 = vmax.f32 %v376, %v377
          %397 = vmax.xlane.f32.xlu0 %v396
          %v398 = vpop.xlane.xlu0 %397
          %v399 = vmax.f32 %v378, %v379
          %400 = vmax.xlane.f32.xlu0 %v399
          %v401 = vpop.xlane.xlu0 %400
          %v402 = vmax.f32 %v380, %v381
          %403 = vmax.xlane.f32.xlu0 %v402
          %v404 = vpop.xlane.xlu0 %403
          %v405 = vmax.f32 %v382, %v383
          %406 = vmax.xlane.f32.xlu0 %v405
          %v407 = vpop.xlane.xlu0 %406
          %v408 = vsub.f32 %v368, %v386
          %v409 = vsub.f32 %v369, %v386
          %v410 = vsub.f32 %v370, %v389
          %v411 = vsub.f32 %v371, %v389
          %v412 = vsub.f32 %v372, %v392
          %v413 = vsub.f32 %v373, %v392
          %v414 = vsub.f32 %v374, %v395
          %v415 = vsub.f32 %v375, %v395
          %v416 = vsub.f32 %v376, %v398
          %v417 = vsub.f32 %v377, %v398
          %v418 = vsub.f32 %v378, %v401
          %v419 = vsub.f32 %v379, %v401
          %v420 = vsub.f32 %v380, %v404
          %v421 = vsub.f32 %v381, %v404
          %v422 = vsub.f32 %v382, %v407
          %v423 = vsub.f32 %v383, %v407
          %v424 = vmul.f32 %v408, 1.442695
          %v425 = vpow.pop %v424
          %v426 = vmul.f32 %v409, 1.442695
          %v427 = vpow.pop %v426
          %v428 = vmul.f32 %v410, 1.442695
          %v429 = vpow.pop %v428
          %v430 = vmul.f32 %v411, 1.442695
          %v431 = vpow.pop %v430
          %v432 = vmul.f32 %v412, 1.442695
          %v433 = vpow.pop %v432
          %v434 = vmul.f32 %v413, 1.442695
          %v435 = vpow.pop %v434
          %v436 = vmul.f32 %v414, 1.442695
          %v437 = vpow.pop %v436
          %v438 = vmul.f32 %v415, 1.442695
          %v439 = vpow.pop %v438
          %v440 = vmul.f32 %v416, 1.442695
          %v441 = vpow.pop %v440
          %v442 = vmul.f32 %v417, 1.442695
          %v443 = vpow.pop %v442
          %v444 = vmul.f32 %v418, 1.442695
          %v445 = vpow.pop %v444
          %v446 = vmul.f32 %v419, 1.442695
          %v447 = vpow.pop %v446
          %v448 = vmul.f32 %v420, 1.442695
          %v449 = vpow.pop %v448
          %v450 = vmul.f32 %v421, 1.442695
          %v451 = vpow.pop %v450
          %v452 = vmul.f32 %v422, 1.442695
          %v453 = vpow.pop %v452
          %v454 = vmul.f32 %v423, 1.442695
          %v455 = vpow.pop %v454
          %v456 = vadd.f32 %v425, %v427
          %457 = vadd.xlane.f32.xlu0 %v456
          %v458 = vpop.xlane.xlu0 %457
          %v459 = vadd.f32 %v429, %v431
          %460 = vadd.xlane.f32.xlu0 %v459
          %v461 = vpop.xlane.xlu0 %460
          %v462 = vadd.f32 %v433, %v435
          %463 = vadd.xlane.f32.xlu0 %v462
          %v464 = vpop.xlane.xlu0 %463
          %v465 = vadd.f32 %v437, %v439
          %466 = vadd.xlane.f32.xlu0 %v465
          %v467 = vpop.xlane.xlu0 %466
          %v468 = vadd.f32 %v441, %v443
          %469 = vadd.xlane.f32.xlu0 %v468
          %v470 = vpop.xlane.xlu0 %469
          %v471 = vadd.f32 %v445, %v447
          %472 = vadd.xlane.f32.xlu0 %v471
          %v473 = vpop.xlane.xlu0 %472
          %v474 = vadd.f32 %v449, %v451
          %475 = vadd.xlane.f32.xlu0 %v474
          %v476 = vpop.xlane.xlu0 %475
          %v477 = vadd.f32 %v453, %v455
          %478 = vadd.xlane.f32.xlu0 %v477
          %v479 = vpop.xlane.xlu0 %478
          %v480 = vrcp.pop %v458
          %v481 = vmul.f32 1.0, %v480
          %v482 = vrcp.pop %v461
          %v483 = vmul.f32 1.0, %v482
          %v484 = vrcp.pop %v464
          %v485 = vmul.f32 1.0, %v484
          %v486 = vrcp.pop %v467
          %v487 = vmul.f32 1.0, %v486
          %v488 = vrcp.pop %v470
          %v489 = vmul.f32 1.0, %v488
          %v490 = vrcp.pop %v473
          %v491 = vmul.f32 1.0, %v490
          %v492 = vrcp.pop %v476
          %v493 = vmul.f32 1.0, %v492
          %v494 = vrcp.pop %v479
          %v495 = vmul.f32 1.0, %v494
          %v496 = vmul.f32 %v425, %v481
          %v497 = vmul.f32 %v427, %v481
          %v498 = vmul.f32 %v429, %v483
          %v499 = vmul.f32 %v431, %v483
          %v500 = vmul.f32 %v433, %v485
          %v501 = vmul.f32 %v435, %v485
          %v502 = vmul.f32 %v437, %v487
          %v503 = vmul.f32 %v439, %v487
          %v504 = vmul.f32 %v441, %v489
          %v505 = vmul.f32 %v443, %v489
          %v506 = vmul.f32 %v445, %v491
          %v507 = vmul.f32 %v447, %v491
          %v508 = vmul.f32 %v449, %v493
          %v509 = vmul.f32 %v451, %v493
          %v510 = vmul.f32 %v453, %v495
          %v511 = vmul.f32 %v455, %v495
          %512 = vst [vmem:[#allocation2] sm:$0xff] %v496
          %513 = vst [vmem:[#allocation2 + $0x8] sm:$0xff] %v497
          %514 = vst [vmem:[#allocation2 + $0x10] sm:$0xff] %v498
          %515 = vst [vmem:[#allocation2 + $0x18] sm:$0xff] %v499
          %516 = vst [vmem:[#allocation2 + $0x20] sm:$0xff] %v500
          %517 = vst [vmem:[#allocation2 + $0x28] sm:$0xff] %v501
          %518 = vst [vmem:[#allocation2 + $0x30] sm:$0xff] %v502
          %519 = vst [vmem:[#allocation2 + $0x38] sm:$0xff] %v503
          %s520 = scalar_lea.vmem [#allocation2], 64
          %521 = vst [vmem:[%s520] sm:$0xff] %v504
          %522 = vst [vmem:[%s520 + $0x8] sm:$0xff] %v505
          %523 = vst [vmem:[%s520 + $0x10] sm:$0xff] %v506
          %524 = vst [vmem:[%s520 + $0x18] sm:$0xff] %v507
          %525 = vst [vmem:[%s520 + $0x20] sm:$0xff] %v508
          %526 = vst [vmem:[%s520 + $0x28] sm:$0xff] %v509
          %527 = vst [vmem:[%s520 + $0x30] sm:$0xff] %v510
          %528 = vst [vmem:[%s520 + $0x38] sm:$0xff] %v511
          %v529 = vadd.f32 %v496, %v504
          %v530 = vadd.f32 %v497, %v505
          %v531 = vadd.f32 %v498, %v506
          %v532 = vadd.f32 %v499, %v507
          %v533 = vadd.f32 %v500, %v508
          %v534 = vadd.f32 %v501, %v509
          %v535 = vadd.f32 %v502, %v510
          %v536 = vadd.f32 %v503, %v511
          %s537 = scalar_lea.vmem [#allocation2], 128
          %538 = vst [vmem:[%s537] sm:$0xff] %v529
          %539 = vst [vmem:[%s537 + $0x8] sm:$0xff] %v530
          %540 = vst [vmem:[%s537 + $0x10] sm:$0xff] %v531
          %541 = vst [vmem:[%s537 + $0x18] sm:$0xff] %v532
          %542 = vst [vmem:[%s537 + $0x20] sm:$0xff] %v533
          %543 = vst [vmem:[%s537 + $0x28] sm:$0xff] %v534
          %544 = vst [vmem:[%s537 + $0x30] sm:$0xff] %v535
          %545 = vst [vmem:[%s537 + $0x38] sm:$0xff] %v536
          %v546 = vadd.f32 %v323, %v325
          %v547 = vadd.f32 %v546, %v327
          %v548 = vadd.f32 %v547, %v329
          %v549 = vadd.f32 %v548, %v331
          %v550 = vadd.f32 %v549, %v333
          %v551 = vadd.f32 %v550, %v335
          %v552 = vadd.f32 %v551, %v337
          %v553 = vrot.slane %v552, 4
          %v554 = vadd.f32 %v552, %v553
          %v555 = vrot.slane %v554, 2
          %v556 = vadd.f32 %v554, %v555
          %v557 = vrot.slane %v556, 1
          %v558 = vadd.f32 %v556, %v557
          %v559 = vadd.f32 %v324, %v326
          %v560 = vadd.f32 %v559, %v328
          %v561 = vadd.f32 %v560, %v330
          %v562 = vadd.f32 %v561, %v332
          %v563 = vadd.f32 %v562, %v334
          %v564 = vadd.f32 %v563, %v336
          %v565 = vadd.f32 %v564, %v338
          %v566 = vrot.slane %v565, 4
          %v567 = vadd.f32 %v565, %v566
          %v568 = vrot.slane %v567, 2
          %v569 = vadd.f32 %v567, %v568
          %v570 = vrot.slane %v569, 1
          %v571 = vadd.f32 %v569, %v570
          %v574 = vcombine.low %v558, %v571
          %v576 = vunpack.c.l.s4 1966171168
          %v577 = vunpack.c.0.s8 %v576
          %v578 = vlaneseq
          %v579 = vshrl.u32 %v578, 7
          %v580 = vsub.s32 %v577, %v579
          %v581 = vrot.slane %v574, %v580
          %v583 = vunpack.c.l.s4 1966171168
          %v584 = vunpack.c.0.s8 %v583
          %v585 = vlaneseq
          %v586 = vshrl.u32 %v585, 7
          %v587 = vsub.s32 %v584, %v586
          %v588 = vrot.slane %v581, %v587
          %v590 = vlaneseq
          %vm591 = vcmp.ge.s32.totalorder %v590, 0
          %vm592 = vcmp.lt.s32.totalorder %v590, 256
          %vm593 = vmand %vm591, %vm592
          %594 = vst.msk [vmem:[%s308] sm:$0x3] %vm593, %v588
          %595 = vst [vmem:[%s304] sm:$0x1] 0.0
        $region52: #{_view_pred_loss_fn.1} parent=35 // pred_fallthru
          _
        %v596 = vld [vmem:[%s266] sm:$0xff]
        %v597 = vld [vmem:[%s266 + $0x8] sm:$0xff]
        %v598 = vld [vmem:[%s266 + $0x10] sm:$0xff]
        %v599 = vld [vmem:[%s266 + $0x18] sm:$0xff]
        %v604 = vunpack.c.l.b16 %v596
        %v605 = vunpack.c.h.b16 %v596
        %v606 = vunpack.c.l.b16 %v597
        %v607 = vunpack.c.h.b16 %v597
        %v608 = vunpack.c.l.b16 %v598
        %v609 = vunpack.c.h.b16 %v598
        %v610 = vunpack.c.l.b16 %v599
        %v611 = vunpack.c.h.b16 %v599
        %v612 = vpack.c.b16 %v606, %v604
        %v613 = vpack.c.b16 %v607, %v605
        %v614 = vpack.c.b16 %v610, %v608
        %v615 = vpack.c.b16 %v611, %v609
        %v620 = vmax.bf16 %v612, %v613
        %621 = vmax.xlane.bf16.xlu0 %v620
        %v622 = vpop.xlane.xlu0 %621
        %v623 = vmax.bf16 %v614, %v615
        %624 = vmax.xlane.bf16.xlu0 %v623
        %v625 = vpop.xlane.xlu0 %624
        %v626 = vunpack.c.l.bf16 %v622
        %v627 = vunpack.c.h.bf16 %v622
        %v628 = vunpack.c.l.bf16 %v625
        %v629 = vunpack.c.h.bf16 %v625
        %v630 = vunpack.c.l.bf16 %v596
        %v631 = vunpack.c.h.bf16 %v596
        %v632 = vunpack.c.l.bf16 %v597
        %v633 = vunpack.c.h.bf16 %v597
        %v634 = vunpack.c.l.bf16 %v598
        %v635 = vunpack.c.h.bf16 %v598
        %v636 = vunpack.c.l.bf16 %v599
        %v637 = vunpack.c.h.bf16 %v599
        %v638 = vsub.f32 %v630, %v626
        %v639 = vsub.f32 %v631, %v626
        %v640 = vsub.f32 %v632, %v627
        %v641 = vsub.f32 %v633, %v627
        %v642 = vsub.f32 %v634, %v628
        %v643 = vsub.f32 %v635, %v628
        %v644 = vsub.f32 %v636, %v629
        %v645 = vsub.f32 %v637, %v629
        %v646 = vstv %s309
        %v647 = vmul.f32 %v638, %v646
        %v648 = vmul.f32 %v639, %v646
        %v649 = vmul.f32 %v640, %v646
        %v650 = vmul.f32 %v641, %v646
        %v651 = vmul.f32 %v642, %v646
        %v652 = vmul.f32 %v643, %v646
        %v653 = vmul.f32 %v644, %v646
        %v654 = vmul.f32 %v645, %v646
        %v655 = vmul.f32 %v647, 1.442695
        %v656 = vpow.pop %v655
        %v657 = vmul.f32 %v648, 1.442695
        %v658 = vpow.pop %v657
        %v659 = vmul.f32 %v649, 1.442695
        %v660 = vpow.pop %v659
        %v661 = vmul.f32 %v650, 1.442695
        %v662 = vpow.pop %v661
        %v663 = vmul.f32 %v651, 1.442695
        %v664 = vpow.pop %v663
        %v665 = vmul.f32 %v652, 1.442695
        %v666 = vpow.pop %v665
        %v667 = vmul.f32 %v653, 1.442695
        %v668 = vpow.pop %v667
        %v669 = vmul.f32 %v654, 1.442695
        %v670 = vpow.pop %v669
        %v671 = vadd.f32 %v656, %v658
        %672 = vadd.xlane.f32.xlu0 %v671
        %v673 = vpop.xlane.xlu0 %672
        %v674 = vadd.f32 %v660, %v662
        %675 = vadd.xlane.f32.xlu0 %v674
        %v676 = vpop.xlane.xlu0 %675
        %v677 = vadd.f32 %v664, %v666
        %678 = vadd.xlane.f32.xlu0 %v677
        %v679 = vpop.xlane.xlu0 %678
        %v680 = vadd.f32 %v668, %v670
        %681 = vadd.xlane.f32.xlu0 %v680
        %v682 = vpop.xlane.xlu0 %681
        %v683 = vlog2.pop %v673
        %v684 = vmul.f32 %v683, 0.6931472
        %v685 = vlog2.pop %v676
        %v686 = vmul.f32 %v685, 0.6931472
        %v687 = vlog2.pop %v679
        %v688 = vmul.f32 %v687, 0.6931472
        %v689 = vlog2.pop %v682
        %v690 = vmul.f32 %v689, 0.6931472
        %v691 = vsub.f32 %v647, %v684
        %v692 = vsub.f32 %v648, %v684
        %v693 = vsub.f32 %v649, %v686
        %v694 = vsub.f32 %v650, %v686
        %v695 = vsub.f32 %v651, %v688
        %v696 = vsub.f32 %v652, %v688
        %v697 = vsub.f32 %v653, %v690
        %v698 = vsub.f32 %v654, %v690
        %p699 = scmp.eq.s32.totalorder %s27, 1
        %s700 = scalar_select %p699, 0, 2
        %s701 = scalar_select %p311, 1, %s700
        %s702 = smul.u32 %s701, 8
        %s703 = smul.addr %s702, 8
        %s704 = scalar_lea.vmem [#allocation2], %s703
        %v705 = vld [vmem:[%s704] sm:$0xff]
        %v706 = vld [vmem:[%s704 + $0x8] sm:$0xff]
        %v707 = vld [vmem:[%s704 + $0x10] sm:$0xff]
        %v708 = vld [vmem:[%s704 + $0x18] sm:$0xff]
        %v709 = vld [vmem:[%s704 + $0x20] sm:$0xff]
        %v710 = vld [vmem:[%s704 + $0x28] sm:$0xff]
        %v711 = vld [vmem:[%s704 + $0x30] sm:$0xff]
        %v712 = vld [vmem:[%s704 + $0x38] sm:$0xff]
        %v713 = vmul.f32 %v705, %v691
        %v714 = vmul.f32 %v706, %v692
        %v715 = vmul.f32 %v707, %v693
        %v716 = vmul.f32 %v708, %v694
        %v717 = vmul.f32 %v709, %v695
        %v718 = vmul.f32 %v710, %v696
        %v719 = vmul.f32 %v711, %v697
        %v720 = vmul.f32 %v712, %v698
        %v721 = vadd.f32 %v713, %v714
        %v722 = vadd.f32 %v721, %v715
        %v723 = vadd.f32 %v722, %v716
        %v724 = vadd.f32 %v723, %v717
        %v725 = vadd.f32 %v724, %v718
        %v726 = vadd.f32 %v725, %v719
        %v727 = vadd.f32 %v726, %v720
        %728 = vadd.xlane.f32.xlu0 %v727
        %v729 = vpop.xlane.xlu0 %728
        %v730 = vrot.slane %v729, 4
        %v731 = vadd.f32 %v729, %v730
        %v732 = vrot.slane %v731, 2
        %v733 = vadd.f32 %v731, %v732
        %v734 = vrot.slane %v733, 1
        %v735 = vadd.f32 %v733, %v734
        %s736 = vtos %v735
        %s737 = ssub.f32 0.0, %s736
        %v738 = vld [vmem:[%s304] sm:$0x1]
        %v739 = vstv %s737
        %v740 = vadd.f32 %v738, %v739
        %741 = vst [vmem:[%s304] sm:$0x1] %v740
        %p742 = scmp.lt.s32.totalorder %s26, 0
        %s743 = scalar_select %p742, %s26, 0
        %s744 = scalar_lea.vmem %s4, %s743
        %p745 = scmp.lt.s32.totalorder %s26, 0
        %s746 = scalar_select %p745, %s26, 0
        %s747 = smul.addr %s746, 2
        %s748 = scalar_lea.vmem %s5, %s747
        // Predicated region
        $region53: #{_view_pred_loss_fn.1} parent=35 // pred_check
          %p749 = pneg %p148
        $region54: #{_view_pred_loss_fn.1} parent=35 // pred_check_branch
          %751 = sbr.rel (%p749) target = $region56
        $region55: #{_view_pred_loss_fn.1} parent=35 // pred_region
          _
        $region56: #{_view_pred_loss_fn.1} parent=35 // pred_fallthru
          _
        // Predicated region
        $region57: #{_view_pred_loss_fn.1} parent=35 // pred_check
          %p752 = pneg %p174
        $region58: #{_view_pred_loss_fn.1} parent=35 // pred_check_branch
          %754 = sbr.rel (%p752) target = $region60
        $region59: #{_view_pred_loss_fn.1} parent=35 // pred_region
          _
        $region60: #{_view_pred_loss_fn.1} parent=35 // pred_fallthru
          _
        // Predicated region
        $region61: #{_view_pred_loss_fn.1} parent=35 // pred_check
          %p755 = pneg %p148
        $region62: #{_view_pred_loss_fn.1} parent=35 // pred_check_branch
          %757 = sbr.rel (%p755) target = $region64
        $region63: #{_view_pred_loss_fn.1} parent=35 // pred_region
          %p758 = scmp.lt.s32.totalorder %s26, 0
          %s759 = scalar_select %p758, %s26, 0
          %s760 = scalar_lea.vmem %s4, %s759
        $region64: #{_view_pred_loss_fn.1} parent=35 // pred_fallthru
          _
        // Predicated region
        $region65: #{_view_pred_loss_fn.1} parent=35 // pred_check
          %p761 = pneg %p174
        $region66: #{_view_pred_loss_fn.1} parent=35 // pred_check_branch
          %763 = sbr.rel (%p761) target = $region68
        $region67: #{_view_pred_loss_fn.1} parent=35 // pred_region
          %p764 = scmp.lt.s32.totalorder %s26, 0
          %s765 = scalar_select %p764, %s26, 0
          %s766 = smul.addr %s765, 2
          %s767 = scalar_lea.vmem %s5, %s766
        $region68: #{_view_pred_loss_fn.1} parent=35 // pred_fallthru
          _
      $region36: #{_view_pred_loss_fn.1} parent=5 // pred_fallthru
        _
      %p768 = scmp.le.s32.totalorder 2, %s17
      // Predicated region
      $region69: #{_view_pred_loss_fn.1} parent=5 // pred_check
        %p769 = pneg %p768
      $region70: #{_view_pred_loss_fn.1} parent=5 // pred_check_branch
        %771 = sbr.rel (%p769) target = $region72
      $region71: #{_view_pred_loss_fn.1} parent=5 // pred_region
        %s772 = ssub.s32 %s17, 2
      $region72: #{_view_pred_loss_fn.1} parent=5 // pred_fallthru
        _
    $region6: #{_view_pred_loss_fn.1} parent=1 // loop_footer
      %s21 = sadd.s32 1, %s17
    $region7: #{_view_pred_loss_fn.1} parent=1 // loop_footer_branch
      %16 = sbr.rel target = $region3
    $region8: #{_view_pred_loss_fn.1} parent=1 // loop_exit
      _
    %773 = vsyncpa [#allocation4], 1
    %s774 = scalar_lea.sflag [#allocation4], 1
    %775 = vsyncpa %s774, 1
    %776 = vsyncpa [#allocation8], 1
    %777 = vsyncpa [#allocation5], 1
    %s778 = scalar_lea.sflag [#allocation5], 1
    %779 = vsyncpa %s778, 1

</llo_original>
